<compile_context>
chip_gen: v7x
topology: tpu7x:2x2x1
jax: 0.10.0
libtpu: 0.0.40
codegen_flags: <defaults>
</compile_context>

<pallas_src>
import functools

import jax
import jax.numpy as jnp
from jax.experimental import pallas as pl
from jax.experimental.pallas import tpu as pltpu

LANE = 128
MAX_LANES = 32768


def _scale_kernel(s_ref, x_ref, o_ref, *, native_mul):
    # s_ref: (1,) f32 scalar in SMEM; x_ref / o_ref: VMEM tiles.
    if native_mul:
        # Native-dtype multiply (bf16/f16 on v6e/v7x): halves VPU op count.
        o_ref[...] = x_ref[...] * s_ref[0].astype(o_ref.dtype)
    else:
        # Promote to f32 in-register, multiply, cast back on store.
        o_ref[...] = (x_ref[...].astype(jnp.float32) * s_ref[0]).astype(o_ref.dtype)


@functools.lru_cache(maxsize=1)
def _device_defaults():
    """(per-buffer block bytes, native sub-32-bit multiply ok) for this chip."""
    try:
        kind = jax.devices()[0].device_kind.lower()
    except Exception:  # pragma: no cover - defensive
        kind = ""
    if "v5e" in kind or "v5 lite" in kind or "v5lite" in kind:
        # 4 buffers x 3 MiB = 12 MiB < v5e's 16 MiB default scoped VMEM.
        return 3 * 1024 * 1024, False
    if "v6" in kind or "v7" in kind:
        # 4 buffers x 6 MiB = 24 MiB < 32 MiB default scoped VMEM (v6e/v7x).
        return 6 * 1024 * 1024, True
    # Unknown chip: stay under the smallest (16 MiB) default scoped limit.
    return 3 * 1024 * 1024, False


def _round_up(a, m):
    return -(-a // m) * m


def _plan(n, bytes_per_elem, sub, block_bytes):
    """Lane-dense 2D view, block shape, grid for a flat size-n array.

    Assumes n % LANE == 0 (caller pads otherwise).
    """
    # Widest power-of-two lane count (<= 32768) that divides n.
    cols = LANE
    while cols * 2 <= MAX_LANES and n % (cols * 2) == 0:
        cols *= 2
    rows = n // cols

    # Per-buffer row cap from the block-byte budget, sublane-aligned.
    cap = max(sub, (block_bytes // (cols * bytes_per_elem)) // sub * sub)
    num_blocks = pl.cdiv(rows, cap)
    if rows >= 2 * sub:
        # Keep >= 2 (and even) grid steps: both v7x TCs get work, and the
        # software pipeline always has a prefetch to overlap.
        num_blocks = max(num_blocks, 2)
        if num_blocks % 2:
            num_blocks += 1

    if rows <= sub:
        tile_rows = rows  # full-extent block (legal even if < 8)
    else:
        tile_rows = min(rows, _round_up(pl.cdiv(rows, num_blocks), sub))

    view = (rows, cols)
    block = (tile_rows, cols)
    grid = (pl.cdiv(rows, tile_rows),)
    return view, block, grid, (lambda i: (i, 0))


@jax.jit
def scale_forward(x, scale):
    """Elementwise multiply `x` (any shape/dtype) by scalar parameter `scale`."""
    orig_shape = x.shape
    n = x.size
    in_dtype = x.dtype
    # Match PyTorch promotion: float input keeps dtype, int/bool -> float32.
    out_dtype = in_dtype if jnp.issubdtype(in_dtype, jnp.floating) else jnp.float32
    if n == 0:
        return x.astype(out_dtype)

    in_item = jnp.dtype(in_dtype).itemsize
    out_item = jnp.dtype(out_dtype).itemsize
    # Sublane packing granularity of the narrowest participating dtype.
    sub = 8 * max(1, 4 // min(in_item, out_item))

    block_bytes, native_ok = _device_defaults()
    native_mul = native_ok and in_dtype == out_dtype and in_item == 2

    # Flatten (pure reshape). Rare non-128-divisible sizes are padded once so
    # the kernel always runs lane-dense at full vreg utilization.
    flat = x.reshape((n,))
    if n % LANE != 0:
        n_pad = _round_up(n, sub * LANE)
        flat = jnp.pad(flat, (0, n_pad - n))
    else:
        n_pad = n

    view, block, grid, index_map = _plan(
        n_pad, max(in_item, out_item), sub, block_bytes)
    x2d = flat.reshape(view)
    s = jnp.asarray(scale, dtype=jnp.float32).reshape((1,))

    out2d = pl.pallas_call(
        functools.partial(_scale_kernel, native_mul=native_mul),
        out_shape=jax.ShapeDtypeStruct(view, out_dtype),
        grid=grid,
        in_specs=[
            pl.BlockSpec(memory_space=pltpu.MemorySpace.SMEM),  # scale scalar
            pl.BlockSpec(block, index_map),                     # x tile
        ],
        out_specs=pl.BlockSpec(block, index_map),
        compiler_params=pltpu.CompilerParams(
            dimension_semantics=("parallel",),
        ),
        cost_estimate=pl.CostEstimate(
            flops=n_pad,
            transcendentals=0,
            bytes_accessed=n_pad * (in_item + out_item),
        ),
    )(s, x2d)

    out = out2d.reshape((n_pad,))
    if n_pad != n:
        out = out[:n]
    return out.reshape(orig_shape)


class Scale:
    """JAX/Pallas equivalent of the PyTorch Scale module (forward pass)."""
    # TODO(synk): parameter is forward-only here; training/grad of `scale` is
    # left to the surrounding JAX framework (autodiff of x*scale works as-is).

    def __init__(self, scale: float = 1.0):
        self.scale = jnp.array([scale], dtype=jnp.float32)

    def __call__(self, x):
        return scale_forward(x, self.scale)


if __name__ == "__main__":
    key = jax.random.PRNGKey(0)
    module = Scale(scale=1.5)

    # Primary test: NCHW input matching PyTorch conv conventions.
    x = jax.random.normal(key, (2, 4, 16, 16), dtype=jnp.float32)
    y = jax.block_until_ready(module(x))
    assert y.shape == x.shape and y.dtype == x.dtype
    assert jnp.allclose(y, x * 1.5, atol=1e-6), "f32 mismatch vs reference"

    # Native-dtype path: bf16 stays bf16 through HBM.
    xb = jax.random.normal(jax.random.PRNGKey(1), (2, 4, 16, 16)).astype(jnp.bfloat16)
    yb = jax.block_until_ready(module(xb))
    refb = (xb.astype(jnp.float32) * 1.5).astype(jnp.bfloat16)
    assert yb.dtype == jnp.bfloat16
    assert jnp.allclose(yb.astype(jnp.float32), refb.astype(jnp.float32),
                        atol=1e-2, rtol=1e-2), "bf16 mismatch vs reference"

    # Ragged path: element count not divisible by 128 (padded + sliced back).
    xo = jax.random.normal(jax.random.PRNGKey(2), (3, 5, 7), dtype=jnp.float32)
    yo = jax.block_until_ready(module(xo))
    assert yo.shape == xo.shape
    assert jnp.allclose(yo, xo * 1.5, atol=1e-6), "ragged-size mismatch vs reference"

    # Integer input promotes to float32 output (PyTorch promotion semantics).
    xi = (jnp.arange(128, dtype=jnp.int32) - 64).reshape(4, 32)
    yi = jax.block_until_ready(module(xi))
    assert yi.dtype == jnp.float32
    assert jnp.allclose(yi, xi.astype(jnp.float32) * 1.5, atol=1e-6), "int mismatch"

    # Multi-block path: big enough to force >= 2 grid steps.
    xl = jax.random.normal(jax.random.PRNGKey(3), (4, 16, 128, 128), dtype=jnp.float32)
    yl = jax.block_until_ready(module(xl))
    assert jnp.allclose(yl, xl * 1.5, atol=1e-6), "multi-block mismatch vs reference"

    print("KERNEL_OK")
</pallas_src>

<mosaic_0001>
module attributes {stable_mosaic.version = 11 : i64} {
  func.func @_scale_kernel(%arg0: i32, %arg1: memref<1xf32, #tpu.memory_space<smem>>, %arg2: memref<1x2048xf32, #tpu.memory_space<vmem>>, %arg3: memref<1x2048xf32, #tpu.memory_space<vmem>>) attributes {dimension_semantics = [#tpu.dimension_semantics<parallel>], iteration_bounds = array<i64: 1>, scalar_prefetch = 0 : i64, scratch_operands = 0 : i64, tpu.core_type = #tpu.core_type<tc>, window_params = [{transform_indices = @transform_0, window_bounds = array<i64: 1>}, {transform_indices = @transform_1, window_bounds = array<i64: 1, 2048>}, {transform_indices = @transform_2, window_bounds = array<i64: 1, 2048>}]} {
    %c0 = arith.constant 0 : index
    %c0_0 = arith.constant 0 : index
    %0 = vector.load %arg2[%c0, %c0_0] : memref<1x2048xf32, #tpu.memory_space<vmem>>, vector<1x2048xf32>
    %c0_1 = arith.constant 0 : index
    %1 = memref.load %arg1[%c0_1] : memref<1xf32, #tpu.memory_space<smem>>
    %2 = vector.broadcast %1 : f32 to vector<1x2048xf32>
    %3 = arith.mulf %0, %2 : vector<1x2048xf32>
    %c0_2 = arith.constant 0 : index
    %c0_3 = arith.constant 0 : index
    %4 = vector.load %arg3[%c0_2, %c0_3] : memref<1x2048xf32, #tpu.memory_space<vmem>>, vector<1x2048xf32>
    tpu.vector_store %arg3[%c0_2, %c0_3], %3 {strides = array<i32>} : memref<1x2048xf32, #tpu.memory_space<vmem>>, vector<1x2048xf32>,
    return
  }
  func.func @transform_0(%arg0: i32) -> i32 {
    %c0_i32 = arith.constant 0 : i32
    %c0_i32_0 = arith.constant 0 : i32
    return %c0_i32 : i32
  }
  func.func @transform_1(%arg0: i32) -> (i32, i32) {
    %c0_i32 = arith.constant 0 : i32
    %c0_i32_0 = arith.constant 0 : i32
    return %arg0, %c0_i32 : i32, i32
  }
  func.func @transform_2(%arg0: i32) -> (i32, i32) {
    %c0_i32 = arith.constant 0 : i32
    %c0_i32_0 = arith.constant 0 : i32
    return %arg0, %c0_i32 : i32, i32
  }
}

</mosaic_0001>

<llo_original>
// kernel: scale_forward.1
$region0: #{scale_forward.1}
  #allocation0 [shape = 'u32[]', space=smem, size = 0x4, offset = 0x4, fixed_abs, tag = 'smem constant byte address 0x4 - core index']
  #allocation1 [shape = 'u32[144,128]{1,0:T(1,128)}', space=vmem, size = 0x12000, scoped, tag = 'internal scratch']
  #allocation2 [shape = 'f32[1]{0:T(128)S(6)}', space=smem, size = 0x200, scoped, tag = 'scoped memory for scale_forward.1']
  %s0 = inlined_call_operand.<no memory space> [shape: f32[1], index: 0, kind: input, shape index: {}]
  %s1 = inlined_call_operand.vmem [shape: f32[1,2048], index: 1, kind: input, shape index: {}]
  %s2 = inlined_call_operand.vmem [shape: f32[1,2048], index: 2, kind: output, shape index: {}]
  %s3 = sld [smem:[#allocation0]]
  $region18: #{scale_forward.1} parent=0
    _
  %s5 = ssub.s32 1, %s3
  %s6 = scalar_select 0, %s5, %s3
  %7 = sst [smem:[#allocation2]] %s0
  // Predicated region
  $region2: #{scale_forward.1} parent=0 // pred_check
    _
  $region3: #{scale_forward.1} parent=0 // pred_check_branch
    %9 = sbr.rel (0) target = $region5
  $region4: #{scale_forward.1} parent=0 // pred_region
    _
  $region5: #{scale_forward.1} parent=0 // pred_fallthru
    _
  // Predicated region
  $region6: #{scale_forward.1} parent=0 // pred_check
    _
  $region7: #{scale_forward.1} parent=0 // pred_check_branch
    %11 = sbr.rel (0) target = $region9
  $region8: #{scale_forward.1} parent=0 // pred_region
    _
  $region9: #{scale_forward.1} parent=0 // pred_fallthru
    _
  %v12 = vld [vmem:[%s1] sm:$0xff]
  %v13 = vld [vmem:[%s1 + $0x8] sm:$0xff]
  %s14 = sld [smem:[#allocation2]]
  %v15 = vstv %s14
  %v16 = vmul.f32 %v12, %v15
  %v17 = vmul.f32 %v13, %v15
  %18 = vst [vmem:[%s2] sm:$0xff] %v16
  %19 = vst [vmem:[%s2 + $0x8] sm:$0xff] %v17
  // Predicated region
  $region10: #{scale_forward.1} parent=0 // pred_check
    _
  $region11: #{scale_forward.1} parent=0 // pred_check_branch
    %21 = sbr.rel (0) target = $region13
  $region12: #{scale_forward.1} parent=0 // pred_region
    _
  $region13: #{scale_forward.1} parent=0 // pred_fallthru
    _
  // Predicated region
  $region14: #{scale_forward.1} parent=0 // pred_check
    _
  $region15: #{scale_forward.1} parent=0 // pred_check_branch
    %23 = sbr.rel (0) target = $region17
  $region16: #{scale_forward.1} parent=0 // pred_region
    _
  $region17: #{scale_forward.1} parent=0 // pred_fallthru
    _

</llo_original>
